<compile_context>
chip_gen: v6e
topology: v6e:2x2x1
jax: 0.10.0
libtpu: 0.0.40
codegen_flags: <defaults>
</compile_context>

<pallas_src>
import math

import jax
import jax.numpy as jnp
from jax import lax
from jax.experimental import pallas as pl
from jax.experimental.pallas import tpu as pltpu

_VMEM_LIMIT = 32 * 1024 * 1024


def _pick_tile(total, preferred, align=8):
    """Largest sublane-aligned tile <= preferred that divides `total`."""
    if total <= preferred:
        return total
    t = (min(total, preferred) // align) * align
    while t >= align:
        if total % t == 0:
            return t
        t -= align
    return total  # fall back to the full (untiled) extent


# ---------------------------------------------------------------------------
# Kernel 1: fused QKV projection (tiled matmul, weights resident in VMEM)
# ---------------------------------------------------------------------------
def _qkv_proj_kernel(x_ref, w_ref, b_ref, q_ref, k_ref, v_ref):
    # x_ref: (TM, D) f32; w_ref: (3, D, D) bf16; b_ref: (3, 1, D) f32
    x = x_ref[...].astype(jnp.bfloat16)          # bf16 MXU operand
    for idx, out_ref in ((0, q_ref), (1, k_ref), (2, v_ref)):
        acc = jnp.dot(x, w_ref[idx], preferred_element_type=jnp.float32)
        out_ref[...] = (acc + b_ref[idx]).astype(out_ref.dtype)


def _qkv_projection(x2, w3, b3, tm):
    n, d = x2.shape
    out_sds = jax.ShapeDtypeStruct((n, d), jnp.bfloat16)
    return pl.pallas_call(
        _qkv_proj_kernel,
        grid=(n // tm,),
        in_specs=[
            pl.BlockSpec((tm, d), lambda i: (i, 0)),
            pl.BlockSpec((3, d, d), lambda i: (0, 0, 0)),   # resident weights
            pl.BlockSpec((3, 1, d), lambda i: (0, 0, 0)),   # resident bias
        ],
        out_specs=(
            pl.BlockSpec((tm, d), lambda i: (i, 0)),
            pl.BlockSpec((tm, d), lambda i: (i, 0)),
            pl.BlockSpec((tm, d), lambda i: (i, 0)),
        ),
        out_shape=(out_sds, out_sds, out_sds),
        compiler_params=pltpu.CompilerParams(
            dimension_semantics=("parallel",),
            vmem_limit_bytes=_VMEM_LIMIT),
    )(x2, w3, b3)


# ---------------------------------------------------------------------------
# Kernel 2: flash-style attention with online softmax
# ---------------------------------------------------------------------------
def _flash_attn_kernel(q_ref, k_ref, v_ref, o_ref, m_sc, l_sc, acc_sc):
    kv = pl.program_id(2)

    @pl.when(kv == 0)
    def _():
        m_sc[...] = jnp.full_like(m_sc, -jnp.inf)
        l_sc[...] = jnp.zeros_like(l_sc)
        acc_sc[...] = jnp.zeros_like(acc_sc)

    q = q_ref[0]                      # (TQ, D) bf16 (1/sqrt(D) folded into Wq)
    k = k_ref[0]                      # (TK, D) bf16
    v = v_ref[0]                      # (TK, D) bf16

    # scores = q @ k^T, contracting last dims (no materialized transpose).
    s = lax.dot_general(q, k, dimension_numbers=(((1,), (1,)), ((), ())),
                        preferred_element_type=jnp.float32)      # (TQ, TK) f32

    m_prev = m_sc[...]
    m_new = jnp.maximum(m_prev, jnp.max(s, axis=-1, keepdims=True))
    alpha = jnp.exp(m_prev - m_new)
    p = jnp.exp(s - m_new)                                       # f32 softmax
    l_sc[...] = alpha * l_sc[...] + jnp.sum(p, axis=-1, keepdims=True)
    acc_sc[...] = alpha * acc_sc[...] + jnp.dot(
        p.astype(jnp.bfloat16), v, preferred_element_type=jnp.float32)
    m_sc[...] = m_new

    @pl.when(kv == pl.num_programs(2) - 1)
    def _():
        inv = pl.reciprocal(l_sc[...], approx=True)              # EUP slot
        o_ref[0] = (acc_sc[...] * inv).astype(o_ref.dtype)


def _flash_attention(q, k, v, out_dtype, tq, tk):
    b, s, d = q.shape
    return pl.pallas_call(
        _flash_attn_kernel,
        grid=(b, s // tq, s // tk),
        in_specs=[
            pl.BlockSpec((1, tq, d), lambda bb, i, kk: (bb, i, 0)),
            pl.BlockSpec((1, tk, d), lambda bb, i, kk: (bb, kk, 0)),
            pl.BlockSpec((1, tk, d), lambda bb, i, kk: (bb, kk, 0)),
        ],
        out_specs=pl.BlockSpec((1, tq, d), lambda bb, i, kk: (bb, i, 0)),
        out_shape=jax.ShapeDtypeStruct((b, s, d), out_dtype),
        scratch_shapes=[
            pltpu.VMEM((tq, 1), jnp.float32),   # running max
            pltpu.VMEM((tq, 1), jnp.float32),   # running sum
            pltpu.VMEM((tq, d), jnp.float32),   # output accumulator
        ],
        compiler_params=pltpu.CompilerParams(
            dimension_semantics=("parallel", "parallel", "arbitrary"),
            vmem_limit_bytes=_VMEM_LIMIT),
    )(q, k, v)


# ---------------------------------------------------------------------------
# Wrapper
# ---------------------------------------------------------------------------
def pack_qkv_params(w_qkv, b_qkv):
    """One-time param repack: (D,3D)/(3D,) -> (3,D,D) bf16 / (3,1,D) f32,
    with the 1/sqrt(D) attention scale folded into the Q weight and bias."""
    d = w_qkv.shape[0]
    scale = 1.0 / math.sqrt(d)
    w3 = w_qkv.reshape(d, 3, d).transpose(1, 0, 2)   # w3[i] == w_qkv[:, i*d:(i+1)*d]
    b3 = b_qkv.reshape(3, 1, d)
    w3 = w3.at[0].multiply(scale)
    b3 = b3.at[0].multiply(scale)
    return w3.astype(jnp.bfloat16), b3.astype(jnp.float32)


@jax.jit
def self_attention_v2(x, w3, b3):
    """x: (B, S, D) f32; w3: (3, D, D) bf16; b3: (3, 1, D) f32 -> (B, S, D)."""
    B, S, D = x.shape
    tm = _pick_tile(B * S, 256)     # projection row tile
    tq = _pick_tile(S, 256)         # q tile
    tk = _pick_tile(S, 512)         # kv tile

    x2 = x.reshape(B * S, D)
    q2, k2, v2 = _qkv_projection(x2, w3, b3, tm)
    q = q2.reshape(B, S, D)
    k = k2.reshape(B, S, D)
    v = v2.reshape(B, S, D)
    return _flash_attention(q, k, v, x.dtype, tq, tk)


def _reference(x, w_qkv, b_qkv):
    D = x.shape[-1]
    qkv = jnp.einsum("bsd,de->bse", x, w_qkv) + b_qkv
    q, k, v = qkv[..., :D], qkv[..., D:2 * D], qkv[..., 2 * D:]
    scores = jnp.einsum("bqd,bkd->bqk", q, k) / math.sqrt(D)
    attn = jax.nn.softmax(scores, axis=-1)
    return jnp.einsum("bqk,bkd->bqd", attn, v)


if __name__ == "__main__":
    B, S, D = 2, 8, 32

    key = jax.random.PRNGKey(0)
    kx, kw, kb = jax.random.split(key, 3)

    x = jax.random.uniform(kx, (B, S, D), dtype=jnp.float32)
    # Deterministic init mimicking nn.Linear default: U(-1/sqrt(D), 1/sqrt(D)).
    bound = 1.0 / math.sqrt(D)
    w_qkv = jax.random.uniform(kw, (D, 3 * D), jnp.float32, -bound, bound)
    b_qkv = jax.random.uniform(kb, (3 * D,), jnp.float32, -bound, bound)

    w3, b3 = pack_qkv_params(w_qkv, b_qkv)

    out = self_attention_v2(x, w3, b3)
    out = jax.block_until_ready(out)

    ref = _reference(x, w_qkv, b_qkv)
    assert out.shape == (B, S, D)
    # Tolerance accounts for bf16 MXU operands (f32 accumulation / f32 softmax)
    # and the EUP approximate reciprocal in the softmax denominator.
    assert jnp.allclose(out, ref, atol=2e-2, rtol=2e-2), \
        float(jnp.max(jnp.abs(out - ref)))

    print("KERNEL_OK")
</pallas_src>

<mosaic_0001>
module attributes {stable_mosaic.version = 11 : i64} {
  func.func @_flash_attn_kernel(%arg0: i32, %arg1: i32, %arg2: i32, %arg3: memref<1x8x32xbf16, #tpu.memory_space<vmem>>, %arg4: memref<1x8x32xbf16, #tpu.memory_space<vmem>>, %arg5: memref<1x8x32xbf16, #tpu.memory_space<vmem>>, %arg6: memref<1x8x32xf32, #tpu.memory_space<vmem>>, %arg7: memref<8x1xf32, #tpu.memory_space<vmem>>, %arg8: memref<8x1xf32, #tpu.memory_space<vmem>>, %arg9: memref<8x32xf32, #tpu.memory_space<vmem>>) attributes {dimension_semantics = [#tpu.dimension_semantics<parallel>, #tpu.dimension_semantics<parallel>, #tpu.dimension_semantics<arbitrary>], iteration_bounds = array<i64: 2, 1, 1>, scalar_prefetch = 0 : i64, scratch_operands = 3 : i64, tpu.core_type = #tpu.core_type<tc>, window_params = [{transform_indices = @transform_0, window_bounds = array<i64: 1, 8, 32>}, {transform_indices = @transform_1, window_bounds = array<i64: 1, 8, 32>}, {transform_indices = @transform_2, window_bounds = array<i64: 1, 8, 32>}, {transform_indices = @transform_3, window_bounds = array<i64: 1, 8, 32>}]} {
    %c0_i32 = arith.constant 0 : i32
    %0 = arith.cmpi eq, %arg2, %c0_i32 : i32
    %1 = arith.extui %0 : i1 to i32
    %c0_i32_0 = arith.constant 0 : i32
    %2 = arith.cmpi ne, %1, %c0_i32_0 : i32
    scf.if %2 {
      %cst_26 = arith.constant 0xFF800000 : f32
      %36 = vector.broadcast %cst_26 : f32 to vector<8x1xf32>
      %c0_27 = arith.constant 0 : index
      %c0_28 = arith.constant 0 : index
      %37 = vector.load %arg7[%c0_27, %c0_28] : memref<8x1xf32, #tpu.memory_space<vmem>>, vector<8x1xf32>
      tpu.vector_store %arg7[%c0_27, %c0_28], %36 {strides = array<i32>} : memref<8x1xf32, #tpu.memory_space<vmem>>, vector<8x1xf32>,
      %cst_29 = arith.constant 0.000000e+00 : f32
      %38 = vector.broadcast %cst_29 : f32 to vector<8x1xf32>
      %c0_30 = arith.constant 0 : index
      %c0_31 = arith.constant 0 : index
      %39 = vector.load %arg8[%c0_30, %c0_31] : memref<8x1xf32, #tpu.memory_space<vmem>>, vector<8x1xf32>
      tpu.vector_store %arg8[%c0_30, %c0_31], %38 {strides = array<i32>} : memref<8x1xf32, #tpu.memory_space<vmem>>, vector<8x1xf32>,
      %cst_32 = arith.constant 0.000000e+00 : f32
      %40 = vector.broadcast %cst_32 : f32 to vector<8x32xf32>
      %c0_33 = arith.constant 0 : index
      %c0_34 = arith.constant 0 : index
      %41 = vector.load %arg9[%c0_33, %c0_34] : memref<8x32xf32, #tpu.memory_space<vmem>>, vector<8x32xf32>
      tpu.vector_store %arg9[%c0_33, %c0_34], %40 {strides = array<i32>} : memref<8x32xf32, #tpu.memory_space<vmem>>, vector<8x32xf32>,
    } else {
    }
    %c0 = arith.constant 0 : index
    %c0_1 = arith.constant 0 : index
    %c0_2 = arith.constant 0 : index
    %3 = vector.load %arg3[%c0, %c0_1, %c0_2] : memref<1x8x32xbf16, #tpu.memory_space<vmem>>, vector<1x8x32xbf16>
    %4 = vector.shape_cast %3 : vector<1x8x32xbf16> to vector<8x32xbf16>
    %c0_3 = arith.constant 0 : index
    %c0_4 = arith.constant 0 : index
    %c0_5 = arith.constant 0 : index
    %5 = vector.load %arg4[%c0_3, %c0_4, %c0_5] : memref<1x8x32xbf16, #tpu.memory_space<vmem>>, vector<1x8x32xbf16>
    %6 = vector.shape_cast %5 : vector<1x8x32xbf16> to vector<8x32xbf16>
    %c0_6 = arith.constant 0 : index
    %c0_7 = arith.constant 0 : index
    %c0_8 = arith.constant 0 : index
    %7 = vector.load %arg5[%c0_6, %c0_7, %c0_8] : memref<1x8x32xbf16, #tpu.memory_space<vmem>>, vector<1x8x32xbf16>
    %8 = vector.shape_cast %7 : vector<1x8x32xbf16> to vector<8x32xbf16>
    %cst = arith.constant dense<0.000000e+00> : vector<8x8xf32>
    %9 = tpu.matmul %4, %6, %cst {dimension_numbers = #tpu.dot_dimension_numbers<[1], [1], [0], [0], [0, 0, 1, 0], [], []>} : vector<8x32xbf16>, vector<8x32xbf16>, vector<8x8xf32> -> vector<8x8xf32>
    %c0_9 = arith.constant 0 : index
    %c0_10 = arith.constant 0 : index
    %10 = vector.load %arg7[%c0_9, %c0_10] : memref<8x1xf32, #tpu.memory_space<vmem>>, vector<8x1xf32>
    %cst_11 = arith.constant dense<0xFF800000> : vector<8xf32>
    %11 = vector.multi_reduction <maximumf>, %9, %cst_11 [1] : vector<8x8xf32> to vector<8xf32>
    %12 = vector.shape_cast %11 : vector<8xf32> to vector<8x1xf32>
    %13 = arith.maximumf %10, %12 : vector<8x1xf32>
    %14 = arith.subf %10, %13 : vector<8x1xf32>
    %15 = math.exp %14 : vector<8x1xf32>
    %16 = vector.broadcast %13 : vector<8x1xf32> to vector<8x8xf32>
    %17 = arith.subf %9, %16 : vector<8x8xf32>
    %18 = math.exp %17 : vector<8x8xf32>
    %c0_12 = arith.constant 0 : index
    %c0_13 = arith.constant 0 : index
    %19 = vector.load %arg8[%c0_12, %c0_13] : memref<8x1xf32, #tpu.memory_space<vmem>>, vector<8x1xf32>
    %20 = arith.mulf %15, %19 : vector<8x1xf32>
    %cst_14 = arith.constant dense<0.000000e+00> : vector<8xf32>
    %21 = vector.multi_reduction <add>, %18, %cst_14 [1] : vector<8x8xf32> to vector<8xf32>
    %22 = vector.shape_cast %21 : vector<8xf32> to vector<8x1xf32>
    %23 = arith.addf %20, %22 : vector<8x1xf32>
    %c0_15 = arith.constant 0 : index
    %c0_16 = arith.constant 0 : index
    %24 = vector.load %arg8[%c0_15, %c0_16] : memref<8x1xf32, #tpu.memory_space<vmem>>, vector<8x1xf32>
    tpu.vector_store %arg8[%c0_15, %c0_16], %23 {strides = array<i32>} : memref<8x1xf32, #tpu.memory_space<vmem>>, vector<8x1xf32>,
    %c0_17 = arith.constant 0 : index
    %c0_18 = arith.constant 0 : index
    %25 = vector.load %arg9[%c0_17, %c0_18] : memref<8x32xf32, #tpu.memory_space<vmem>>, vector<8x32xf32>
    %26 = vector.broadcast %15 : vector<8x1xf32> to vector<8x32xf32>
    %27 = arith.mulf %26, %25 : vector<8x32xf32>
    %28 = arith.truncf %18 : vector<8x8xf32> to vector<8x8xbf16>
    %cst_19 = arith.constant dense<0.000000e+00> : vector<8x32xf32>
    %29 = tpu.matmul %28, %8, %cst_19 {dimension_numbers = #tpu.dot_dimension_numbers<[1], [0], [0], [1], [0, 0, 1, 1], [], []>} : vector<8x8xbf16>, vector<8x32xbf16>, vector<8x32xf32> -> vector<8x32xf32>
    %30 = arith.addf %27, %29 : vector<8x32xf32>
    %c0_20 = arith.constant 0 : index
    %c0_21 = arith.constant 0 : index
    %31 = vector.load %arg9[%c0_20, %c0_21] : memref<8x32xf32, #tpu.memory_space<vmem>>, vector<8x32xf32>
    tpu.vector_store %arg9[%c0_20, %c0_21], %30 {strides = array<i32>} : memref<8x32xf32, #tpu.memory_space<vmem>>, vector<8x32xf32>,
    %c0_22 = arith.constant 0 : index
    %c0_23 = arith.constant 0 : index
    %32 = vector.load %arg7[%c0_22, %c0_23] : memref<8x1xf32, #tpu.memory_space<vmem>>, vector<8x1xf32>
    tpu.vector_store %arg7[%c0_22, %c0_23], %13 {strides = array<i32>} : memref<8x1xf32, #tpu.memory_space<vmem>>, vector<8x1xf32>,
    %c0_i32_24 = arith.constant 0 : i32
    %33 = arith.cmpi eq, %arg2, %c0_i32_24 : i32
    %34 = arith.extui %33 : i1 to i32
    %c0_i32_25 = arith.constant 0 : i32
    %35 = arith.cmpi ne, %34, %c0_i32_25 : i32
    scf.if %35 {
      %c0_26 = arith.constant 0 : index
      %c0_27 = arith.constant 0 : index
      %36 = vector.load %arg8[%c0_26, %c0_27] : memref<8x1xf32, #tpu.memory_space<vmem>>, vector<8x1xf32>
      %37 = tpu.reciprocal %36 {approx = true} : vector<8x1xf32> -> vector<8x1xf32>
      %c0_28 = arith.constant 0 : index
      %c0_29 = arith.constant 0 : index
      %38 = vector.load %arg9[%c0_28, %c0_29] : memref<8x32xf32, #tpu.memory_space<vmem>>, vector<8x32xf32>
      %39 = vector.broadcast %37 : vector<8x1xf32> to vector<8x32xf32>
      %40 = arith.mulf %38, %39 : vector<8x32xf32>
      %c0_30 = arith.constant 0 : index
      %c0_31 = arith.constant 0 : index
      %c0_32 = arith.constant 0 : index
      %41 = vector.load %arg6[%c0_30, %c0_31, %c0_32] : memref<1x8x32xf32, #tpu.memory_space<vmem>>, vector<1x8x32xf32>
      %42 = vector.shape_cast %41 : vector<1x8x32xf32> to vector<8x32xf32>
      %43 = vector.shape_cast %40 : vector<8x32xf32> to vector<1x8x32xf32>
      tpu.vector_store %arg6[%c0_30, %c0_31, %c0_32], %43 {strides = array<i32>} : memref<1x8x32xf32, #tpu.memory_space<vmem>>, vector<1x8x32xf32>,
    } else {
    }
    return
  }
  func.func @transform_0(%arg0: i32, %arg1: i32, %arg2: i32) -> (i32, i32, i32) {
    %c0_i32 = arith.constant 0 : i32
    %c0_i32_0 = arith.constant 0 : i32
    return %arg0, %arg1, %c0_i32 : i32, i32, i32
  }
  func.func @transform_1(%arg0: i32, %arg1: i32, %arg2: i32) -> (i32, i32, i32) {
    %c0_i32 = arith.constant 0 : i32
    %c0_i32_0 = arith.constant 0 : i32
    return %arg0, %arg2, %c0_i32 : i32, i32, i32
  }
  func.func @transform_2(%arg0: i32, %arg1: i32, %arg2: i32) -> (i32, i32, i32) {
    %c0_i32 = arith.constant 0 : i32
    %c0_i32_0 = arith.constant 0 : i32
    return %arg0, %arg2, %c0_i32 : i32, i32, i32
  }
  func.func @transform_3(%arg0: i32, %arg1: i32, %arg2: i32) -> (i32, i32, i32) {
    %c0_i32 = arith.constant 0 : i32
    %c0_i32_0 = arith.constant 0 : i32
    return %arg0, %arg1, %c0_i32 : i32, i32, i32
  }
}

module attributes {stable_mosaic.version = 11 : i64} {
  func.func @_qkv_proj_kernel(%arg0: i32, %arg1: memref<16x32xf32, #tpu.memory_space<vmem>>, %arg2: memref<3x32x32xbf16, #tpu.memory_space<vmem>>, %arg3: memref<3x1x32xf32, #tpu.memory_space<vmem>>, %arg4: memref<16x32xbf16, #tpu.memory_space<vmem>>, %arg5: memref<16x32xbf16, #tpu.memory_space<vmem>>, %arg6: memref<16x32xbf16, #tpu.memory_space<vmem>>) attributes {dimension_semantics = [#tpu.dimension_semantics<parallel>], iteration_bounds = array<i64: 1>, scalar_prefetch = 0 : i64, scratch_operands = 0 : i64, tpu.core_type = #tpu.core_type<tc>, window_params = [{transform_indices = @transform_0, window_bounds = array<i64: 16, 32>}, {pipeline_mode = #tpu.pipeline_mode<synchronous>, transform_indices = @transform_1, window_bounds = array<i64: 3, 32, 32>}, {pipeline_mode = #tpu.pipeline_mode<synchronous>, transform_indices = @transform_2, window_bounds = array<i64: 3, 1, 32>}, {transform_indices = @transform_3, window_bounds = array<i64: 16, 32>}, {transform_indices = @transform_4, window_bounds = array<i64: 16, 32>}, {transform_indices = @transform_5, window_bounds = array<i64: 16, 32>}]} {
    %c0 = arith.constant 0 : index
    %c0_0 = arith.constant 0 : index
    %0 = vector.load %arg1[%c0, %c0_0] : memref<16x32xf32, #tpu.memory_space<vmem>>, vector<16x32xf32>
    %1 = arith.truncf %0 : vector<16x32xf32> to vector<16x32xbf16>
    %c0_1 = arith.constant 0 : index
    %c0_2 = arith.constant 0 : index
    %c0_3 = arith.constant 0 : index
    %2 = vector.load %arg2[%c0_1, %c0_2, %c0_3] : memref<3x32x32xbf16, #tpu.memory_space<vmem>>, vector<1x32x32xbf16>
    %3 = vector.shape_cast %2 : vector<1x32x32xbf16> to vector<32x32xbf16>
    %cst = arith.constant dense<0.000000e+00> : vector<16x32xf32>
    %4 = tpu.matmul %1, %3, %cst {dimension_numbers = #tpu.dot_dimension_numbers<[1], [0], [0], [1], [0, 0, 1, 1], [], []>} : vector<16x32xbf16>, vector<32x32xbf16>, vector<16x32xf32> -> vector<16x32xf32>
    %c0_4 = arith.constant 0 : index
    %c0_5 = arith.constant 0 : index
    %c0_6 = arith.constant 0 : index
    %5 = vector.load %arg3[%c0_4, %c0_5, %c0_6] : memref<3x1x32xf32, #tpu.memory_space<vmem>>, vector<1x1x32xf32>
    %6 = vector.shape_cast %5 : vector<1x1x32xf32> to vector<1x32xf32>
    %7 = vector.broadcast %6 : vector<1x32xf32> to vector<16x32xf32>
    %8 = arith.addf %4, %7 : vector<16x32xf32>
    %9 = arith.truncf %8 : vector<16x32xf32> to vector<16x32xbf16>
    %c0_7 = arith.constant 0 : index
    %c0_8 = arith.constant 0 : index
    %10 = vector.load %arg4[%c0_7, %c0_8] : memref<16x32xbf16, #tpu.memory_space<vmem>>, vector<16x32xbf16>
    tpu.vector_store %arg4[%c0_7, %c0_8], %9 {strides = array<i32>} : memref<16x32xbf16, #tpu.memory_space<vmem>>, vector<16x32xbf16>,
    %c1 = arith.constant 1 : index
    %c0_9 = arith.constant 0 : index
    %c0_10 = arith.constant 0 : index
    %11 = vector.load %arg2[%c1, %c0_9, %c0_10] : memref<3x32x32xbf16, #tpu.memory_space<vmem>>, vector<1x32x32xbf16>
    %12 = vector.shape_cast %11 : vector<1x32x32xbf16> to vector<32x32xbf16>
    %cst_11 = arith.constant dense<0.000000e+00> : vector<16x32xf32>
    %13 = tpu.matmul %1, %12, %cst_11 {dimension_numbers = #tpu.dot_dimension_numbers<[1], [0], [0], [1], [0, 0, 1, 1], [], []>} : vector<16x32xbf16>, vector<32x32xbf16>, vector<16x32xf32> -> vector<16x32xf32>
    %c1_12 = arith.constant 1 : index
    %c0_13 = arith.constant 0 : index
    %c0_14 = arith.constant 0 : index
    %14 = vector.load %arg3[%c1_12, %c0_13, %c0_14] : memref<3x1x32xf32, #tpu.memory_space<vmem>>, vector<1x1x32xf32>
    %15 = vector.shape_cast %14 : vector<1x1x32xf32> to vector<1x32xf32>
    %16 = vector.broadcast %15 : vector<1x32xf32> to vector<16x32xf32>
    %17 = arith.addf %13, %16 : vector<16x32xf32>
    %18 = arith.truncf %17 : vector<16x32xf32> to vector<16x32xbf16>
    %c0_15 = arith.constant 0 : index
    %c0_16 = arith.constant 0 : index
    %19 = vector.load %arg5[%c0_15, %c0_16] : memref<16x32xbf16, #tpu.memory_space<vmem>>, vector<16x32xbf16>
    tpu.vector_store %arg5[%c0_15, %c0_16], %18 {strides = array<i32>} : memref<16x32xbf16, #tpu.memory_space<vmem>>, vector<16x32xbf16>,
    %c2 = arith.constant 2 : index
    %c0_17 = arith.constant 0 : index
    %c0_18 = arith.constant 0 : index
    %20 = vector.load %arg2[%c2, %c0_17, %c0_18] : memref<3x32x32xbf16, #tpu.memory_space<vmem>>, vector<1x32x32xbf16>
    %21 = vector.shape_cast %20 : vector<1x32x32xbf16> to vector<32x32xbf16>
    %cst_19 = arith.constant dense<0.000000e+00> : vector<16x32xf32>
    %22 = tpu.matmul %1, %21, %cst_19 {dimension_numbers = #tpu.dot_dimension_numbers<[1], [0], [0], [1], [0, 0, 1, 1], [], []>} : vector<16x32xbf16>, vector<32x32xbf16>, vector<16x32xf32> -> vector<16x32xf32>
    %c2_20 = arith.constant 2 : index
    %c0_21 = arith.constant 0 : index
    %c0_22 = arith.constant 0 : index
    %23 = vector.load %arg3[%c2_20, %c0_21, %c0_22] : memref<3x1x32xf32, #tpu.memory_space<vmem>>, vector<1x1x32xf32>
    %24 = vector.shape_cast %23 : vector<1x1x32xf32> to vector<1x32xf32>
    %25 = vector.broadcast %24 : vector<1x32xf32> to vector<16x32xf32>
    %26 = arith.addf %22, %25 : vector<16x32xf32>
    %27 = arith.truncf %26 : vector<16x32xf32> to vector<16x32xbf16>
    %c0_23 = arith.constant 0 : index
    %c0_24 = arith.constant 0 : index
    %28 = vector.load %arg6[%c0_23, %c0_24] : memref<16x32xbf16, #tpu.memory_space<vmem>>, vector<16x32xbf16>
    tpu.vector_store %arg6[%c0_23, %c0_24], %27 {strides = array<i32>} : memref<16x32xbf16, #tpu.memory_space<vmem>>, vector<16x32xbf16>,
    return
  }
  func.func @transform_0(%arg0: i32) -> (i32, i32) {
    %c0_i32 = arith.constant 0 : i32
    %c0_i32_0 = arith.constant 0 : i32
    return %arg0, %c0_i32 : i32, i32
  }
  func.func @transform_1(%arg0: i32) -> (i32, i32, i32) {
    %c0_i32 = arith.constant 0 : i32
    %c0_i32_0 = arith.constant 0 : i32
    %c0_i32_1 = arith.constant 0 : i32
    %c0_i32_2 = arith.constant 0 : i32
    return %c0_i32, %c0_i32_0, %c0_i32_1 : i32, i32, i32
  }
  func.func @transform_2(%arg0: i32) -> (i32, i32, i32) {
    %c0_i32 = arith.constant 0 : i32
    %c0_i32_0 = arith.constant 0 : i32
    %c0_i32_1 = arith.constant 0 : i32
    %c0_i32_2 = arith.constant 0 : i32
    return %c0_i32, %c0_i32_0, %c0_i32_1 : i32, i32, i32
  }
  func.func @transform_3(%arg0: i32) -> (i32, i32) {
    %c0_i32 = arith.constant 0 : i32
    %c0_i32_0 = arith.constant 0 : i32
    return %arg0, %c0_i32 : i32, i32
  }
  func.func @transform_4(%arg0: i32) -> (i32, i32) {
    %c0_i32 = arith.constant 0 : i32
    %c0_i32_0 = arith.constant 0 : i32
    return %arg0, %c0_i32 : i32, i32
  }
  func.func @transform_5(%arg0: i32) -> (i32, i32) {
    %c0_i32 = arith.constant 0 : i32
    %c0_i32_0 = arith.constant 0 : i32
    return %arg0, %c0_i32 : i32, i32
  }
}

</mosaic_0001>

<llo_original>
// kernel: self_attention_v2.3
$region0: #{self_attention_v2.3}
  #allocation0 [shape = 'u32[]', space=smem, size = 0x4, offset = 0x4, fixed_abs, tag = 'smem constant byte address 0x4 - core index']
  #allocation1 [shape = 'u32[144,128]{1,0:T(1,128)}', space=vmem, size = 0x12000, scoped, tag = 'internal scratch']
  #allocation2 [shape = 'f32[8,1]{1,0:T(8,128)}', space=vmem, size = 0x1000, scoped, tag = 'scratch operand']
  #allocation3 [shape = 'f32[8,1]{1,0:T(8,128)}', space=vmem, size = 0x1000, scoped, tag = 'scratch operand']
  #allocation4 [shape = 'f32[8,32]{1,0:T(8,128)}', space=vmem, size = 0x1000, scoped, tag = 'scratch operand']
  %s0 = inlined_call_operand.vmem [shape: bf16[2,8,32], index: 0, kind: input, shape index: {}]
  %s1 = inlined_call_operand.vmem [shape: bf16[2,8,32], index: 1, kind: input, shape index: {}]
  %s2 = inlined_call_operand.vmem [shape: bf16[2,8,32], index: 2, kind: input, shape index: {}]
  %s3 = inlined_call_operand.hbm [shape: f32[2,8,32], index: 3, kind: output, shape index: {}]
  %s4 = sld [smem:[#allocation0]]
  $region53: #{self_attention_v2.3} parent=0
    _
  %s6 = ssub.s32 1, %s4
  %s7 = scalar_select 0, %s6, %s4
  $region1: #{self_attention_v2.3} parent=0
    #allocation5 [shape = 'u8[8192]{0}', space=vmem, size = 0x2000, scoped, tag = 'output window, operand 0']
    #allocation6 [shape = 's32[2]{0}', space=sflag, size = 0x8, scoped, tag = 'scoped memory for self_attention_v2.3']
    %8 = vsyncpa [#allocation6], 0
    %s9 = scalar_lea.sflag [#allocation6], 1
    %10 = vsyncpa %s9, 0
    loop: start=0, step=1, limit=4
    $region2: #{self_attention_v2.3} parent=1 // loop_pre_header
      _
    $region3: #{self_attention_v2.3} parent=1 // loop_header
      %s12 = sphi 0, %s16
      %p13 = scmp.ge.s32.totalorder %s12, 4
      %s19 = sphi 0, %s38
      %s20 = sphi 0, %s34
      %s21 = sphi 0, %s30
      %s22 = sphi 0, %s19
      %s23 = sphi 0, %s20
      %s24 = sphi 0, %s21
      %s25 = sphi 0, %s22
      %s26 = sphi 0, %s23
      %s27 = sphi 0, %s24
      %s43 = sphi 0, %s45
      %s46 = sphi 0, %s43
      %s47 = sphi 0, %s46
      %s63 = sphi 0, %s47
      %s71 = sphi 0, %s73
      %s74 = sphi 0, %s71
      %s75 = sphi 0, %s74
      %s91 = sphi 0, %s75
      %s99 = sphi 0, %s101
      %s102 = sphi 0, %s99
      %s103 = sphi 0, %s102
      %s119 = sphi 0, %s103
      %s127 = sphi 0, %s129
      %s130 = sphi 0, %s127
      %s131 = sphi 0, %s130
      %s147 = sphi 0, %s131
    $region4: #{self_attention_v2.3} parent=1 // loop_header_branch
      %15 = sbr.rel (%p13) target = $region8
    $region5: #{self_attention_v2.3} parent=1 // loop_body
      %s17 = ssub.s32 %s12, 1
      %s18 = ssub.s32 %s12, 2
      %s28 = sadd.s32 1, %s21
      %p29 = scmp.ge.s32.totalorder %s28, 1
      %s30 = scalar_select %p29, 0, %s28
      %s31 = sadd.s32 1, %s20
      %s32 = scalar_select %p29, %s31, %s20
      %p33 = scmp.ge.s32.totalorder %s32, 1
      %s34 = scalar_select %p33, 0, %s32
      %s35 = sadd.s32 1, %s19
      %s36 = scalar_select %p33, %s35, %s19
      %p37 = scmp.ge.s32.totalorder %s36, 2
      %s38 = scalar_select %p37, 0, %s36
      %s39 = ssub.s32 %s19, %s38
      %s40 = ssub.s32 %s20, %s34
      %s41 = sor.u32 %s39, %s40
      %p42 = scmp.eq.s32.totalorder %s41, 0
      %s44 = sadd.s32 %s43, 1
      %s45 = scalar_select %p42, %s43, %s44
      %p48 = pneg %p42
      %p49 = scmp.eq.s32.totalorder %s12, 1
      %p50 = por %p48, %p49
      %p51 = scmp.ne.s32.totalorder %s43, %s46
      %p52 = scmp.eq.s32.totalorder %s12, 0
      %p53 = por %p51, %p52
      %p54 = scmp.ne.s32.totalorder %s43, %s46
      %p55 = scmp.eq.s32.totalorder %s17, 1
      %p56 = por %p54, %p55
      %p57 = scmp.ne.s32.totalorder %s46, %s47
      %p58 = scmp.eq.s32.totalorder %s17, 0
      %p59 = por %p57, %p58
      %p60 = scmp.ne.s32.totalorder %s46, %s47
      %p61 = scmp.eq.s32.totalorder %s18, 1
      %p62 = por %p60, %p61
      %p64 = scmp.ne.s32.totalorder %s47, %s63
      %p65 = scmp.eq.s32.totalorder %s18, 0
      %p66 = por %p64, %p65
      %s67 = ssub.s32 %s19, %s38
      %s68 = ssub.s32 %s21, %s30
      %s69 = sor.u32 %s67, %s68
      %p70 = scmp.eq.s32.totalorder %s69, 0
      %s72 = sadd.s32 %s71, 1
      %s73 = scalar_select %p70, %s71, %s72
      %p76 = pneg %p70
      %p77 = scmp.eq.s32.totalorder %s12, 1
      %p78 = por %p76, %p77
      %p79 = scmp.ne.s32.totalorder %s71, %s74
      %p80 = scmp.eq.s32.totalorder %s12, 0
      %p81 = por %p79, %p80
      %p82 = scmp.ne.s32.totalorder %s71, %s74
      %p83 = scmp.eq.s32.totalorder %s17, 1
      %p84 = por %p82, %p83
      %p85 = scmp.ne.s32.totalorder %s74, %s75
      %p86 = scmp.eq.s32.totalorder %s17, 0
      %p87 = por %p85, %p86
      %p88 = scmp.ne.s32.totalorder %s74, %s75
      %p89 = scmp.eq.s32.totalorder %s18, 1
      %p90 = por %p88, %p89
      %p92 = scmp.ne.s32.totalorder %s75, %s91
      %p93 = scmp.eq.s32.totalorder %s18, 0
      %p94 = por %p92, %p93
      %s95 = ssub.s32 %s19, %s38
      %s96 = ssub.s32 %s21, %s30
      %s97 = sor.u32 %s95, %s96
      %p98 = scmp.eq.s32.totalorder %s97, 0
      %s100 = sadd.s32 %s99, 1
      %s101 = scalar_select %p98, %s99, %s100
      %p104 = pneg %p98
      %p105 = scmp.eq.s32.totalorder %s12, 1
      %p106 = por %p104, %p105
      %p107 = scmp.ne.s32.totalorder %s99, %s102
      %p108 = scmp.eq.s32.totalorder %s12, 0
      %p109 = por %p107, %p108
      %p110 = scmp.ne.s32.totalorder %s99, %s102
      %p111 = scmp.eq.s32.totalorder %s17, 1
      %p112 = por %p110, %p111
      %p113 = scmp.ne.s32.totalorder %s102, %s103
      %p114 = scmp.eq.s32.totalorder %s17, 0
      %p115 = por %p113, %p114
      %p116 = scmp.ne.s32.totalorder %s102, %s103
      %p117 = scmp.eq.s32.totalorder %s18, 1
      %p118 = por %p116, %p117
      %p120 = scmp.ne.s32.totalorder %s103, %s119
      %p121 = scmp.eq.s32.totalorder %s18, 0
      %p122 = por %p120, %p121
      %s123 = ssub.s32 %s19, %s38
      %s124 = ssub.s32 %s20, %s34
      %s125 = sor.u32 %s123, %s124
      %p126 = scmp.eq.s32.totalorder %s125, 0
      %s128 = sadd.s32 %s127, 1
      %s129 = scalar_select %p126, %s127, %s128
      %p132 = pneg %p126
      %p133 = scmp.eq.s32.totalorder %s12, 1
      %p134 = por %p132, %p133
      %p135 = scmp.ne.s32.totalorder %s127, %s130
      %p136 = scmp.eq.s32.totalorder %s12, 0
      %p137 = por %p135, %p136
      %p138 = scmp.ne.s32.totalorder %s127, %s130
      %p139 = scmp.eq.s32.totalorder %s17, 1
      %p140 = por %p138, %p139
      %p141 = scmp.ne.s32.totalorder %s130, %s131
      %p142 = scmp.eq.s32.totalorder %s17, 0
      %p143 = por %p141, %p142
      %p144 = scmp.ne.s32.totalorder %s130, %s131
      %p145 = scmp.eq.s32.totalorder %s18, 1
      %p146 = por %p144, %p145
      %p148 = scmp.ne.s32.totalorder %s131, %s147
      %p149 = scmp.eq.s32.totalorder %s18, 0
      %p150 = por %p148, %p149
      %p151 = scmp.le.s32.totalorder 1, %s12
      %p152 = scmp.lt.s32.totalorder %s12, 3
      %p153 = pnand %p151, %p152
      %p154 = pneg %p153
      // Predicated region
      $region9: #{self_attention_v2.3} parent=5 // pred_check
        _
      $region10: #{self_attention_v2.3} parent=5 // pred_check_branch
        %156 = sbr.rel (%p153) target = $region12
      $region11: #{self_attention_v2.3} parent=5 // pred_region
        %s157 = ssub.s32 %s12, 1
      $region12: #{self_attention_v2.3} parent=5 // pred_fallthru
        _
      %p158 = scmp.lt.s32.totalorder %s12, 2
      // Predicated region
      $region13: #{self_attention_v2.3} parent=5 // pred_check
        %p159 = pneg %p158
      $region14: #{self_attention_v2.3} parent=5 // pred_check_branch
        %161 = sbr.rel (%p159) target = $region16
      $region15: #{self_attention_v2.3} parent=5 // pred_region
        // Predicated region
        $region17: #{self_attention_v2.3} parent=15 // pred_check
          %p162 = pneg %p53
        $region18: #{self_attention_v2.3} parent=15 // pred_check_branch
          %164 = sbr.rel (%p162) target = $region20
        $region19: #{self_attention_v2.3} parent=15 // pred_region
          %p165 = scmp.lt.s32.totalorder %s19, 1
          %s166 = scalar_select %p165, %s19, 1
          %p167 = scmp.lt.s32.totalorder %s20, 0
          %s168 = scalar_select %p167, %s20, 0
          %s169 = sadd.s32 %s168, %s166
          %s170 = smul.addr %s169, 4
          %s171 = scalar_lea.vmem %s0, %s170
        $region20: #{self_attention_v2.3} parent=15 // pred_fallthru
          _
        // Predicated region
        $region21: #{self_attention_v2.3} parent=15 // pred_check
          %p172 = pneg %p81
        $region22: #{self_attention_v2.3} parent=15 // pred_check_branch
          %174 = sbr.rel (%p172) target = $region24
        $region23: #{self_attention_v2.3} parent=15 // pred_region
          %p175 = scmp.lt.s32.totalorder %s19, 1
          %s176 = scalar_select %p175, %s19, 1
          %p177 = scmp.lt.s32.totalorder %s21, 0
          %s178 = scalar_select %p177, %s21, 0
          %s179 = sadd.s32 %s178, %s176
          %s180 = smul.addr %s179, 4
          %s181 = scalar_lea.vmem %s1, %s180
        $region24: #{self_attention_v2.3} parent=15 // pred_fallthru
          _
        // Predicated region
        $region25: #{self_attention_v2.3} parent=15 // pred_check
          %p182 = pneg %p109
        $region26: #{self_attention_v2.3} parent=15 // pred_check_branch
          %184 = sbr.rel (%p182) target = $region28
        $region27: #{self_attention_v2.3} parent=15 // pred_region
          %p185 = scmp.lt.s32.totalorder %s19, 1
          %s186 = scalar_select %p185, %s19, 1
          %p187 = scmp.lt.s32.totalorder %s21, 0
          %s188 = scalar_select %p187, %s21, 0
          %s189 = sadd.s32 %s188, %s186
          %s190 = smul.addr %s189, 4
          %s191 = scalar_lea.vmem %s2, %s190
        $region28: #{self_attention_v2.3} parent=15 // pred_fallthru
          _
      $region16: #{self_attention_v2.3} parent=5 // pred_fallthru
        _
      %p192 = scmp.le.s32.totalorder 1, %s12
      %p193 = scmp.lt.s32.totalorder %s12, 3
      %p194 = pnand %p192, %p193
      %p195 = pneg %p194
      // Predicated region
      $region29: #{self_attention_v2.3} parent=5 // pred_check
        _
      $region30: #{self_attention_v2.3} parent=5 // pred_check_branch
        %197 = sbr.rel (%p194) target = $region32
      $region31: #{self_attention_v2.3} parent=5 // pred_region
        %s198 = ssub.s32 %s12, 1
        %p199 = scmp.lt.s32.totalorder %s22, 1
        %s200 = scalar_select %p199, %s22, 1
        %p201 = scmp.lt.s32.totalorder %s23, 0
        %s202 = scalar_select %p201, %s23, 0
        %s203 = sadd.s32 %s202, %s200
        %s204 = smul.addr %s203, 4
        %s205 = scalar_lea.vmem %s0, %s204
        %p206 = pneg %p59
        %p207 = pneg %p56
        %p208 = scmp.lt.s32.totalorder %s22, 1
        %s209 = scalar_select %p208, %s22, 1
        %p210 = scmp.lt.s32.totalorder %s24, 0
        %s211 = scalar_select %p210, %s24, 0
        %s212 = sadd.s32 %s211, %s209
        %s213 = smul.addr %s212, 4
        %s214 = scalar_lea.vmem %s1, %s213
        %p215 = pneg %p87
        %p216 = pneg %p84
        %p217 = scmp.lt.s32.totalorder %s22, 1
        %s218 = scalar_select %p217, %s22, 1
        %p219 = scmp.lt.s32.totalorder %s24, 0
        %s220 = scalar_select %p219, %s24, 0
        %s221 = sadd.s32 %s220, %s218
        %s222 = smul.addr %s221, 4
        %s223 = scalar_lea.vmem %s2, %s222
        %p224 = pneg %p115
        %p225 = pneg %p112
        %p226 = pneg %p143
        %p227 = pneg %p140
        %s228 = sand.u32 %s130, 1
        %s229 = scalar_lea.sflag [#allocation6], %s228
        %s230 = sand.u32 %s130, 1
        %s231 = smul.addr %s230, 8
        %s232 = scalar_lea.vmem [#allocation5], %s231
        %p233 = scmp.lt.s32.totalorder %s22, 1
        %s234 = scalar_select %p233, %s22, 1
        %p235 = scmp.lt.s32.totalorder %s23, 0
        %s236 = scalar_select %p235, %s23, 0
        %s237 = sadd.s32 %s236, %s234
        %s238 = smul.addr %s237, 4
        %s239 = scalar_lea.vmem %s0, %s238
        %p240 = scmp.lt.s32.totalorder %s22, 1
        %s241 = scalar_select %p240, %s22, 1
        %p242 = scmp.lt.s32.totalorder %s24, 0
        %s243 = scalar_select %p242, %s24, 0
        %s244 = sadd.s32 %s243, %s241
        %s245 = smul.addr %s244, 4
        %s246 = scalar_lea.vmem %s1, %s245
        %p247 = scmp.lt.s32.totalorder %s22, 1
        %s248 = scalar_select %p247, %s22, 1
        %p249 = scmp.lt.s32.totalorder %s24, 0
        %s250 = scalar_select %p249, %s24, 0
        %s251 = sadd.s32 %s250, %s248
        %s252 = smul.addr %s251, 4
        %s253 = scalar_lea.vmem %s2, %s252
        %p255 = scmp.eq.s32.totalorder %s24, 0
        // Predicated region
        $region33: #{self_attention_v2.3} parent=31 // pred_check
          %p256 = pneg %p255
        $region34: #{self_attention_v2.3} parent=31 // pred_check_branch
          %258 = sbr.rel (%p256) target = $region36
        $region35: #{self_attention_v2.3} parent=31 // pred_region
          %vm259 = vcmask 7168
          %260 = vst.msk [vmem:[#allocation2] sm:$0xff] %vm259, -inf
          %261 = vst.msk [vmem:[#allocation3] sm:$0xff] %vm259, 0.0
          %vm262 = vcmask 261120
          %263 = vst.msk [vmem:[#allocation4] sm:$0xff] %vm262, 0.0
        $region36: #{self_attention_v2.3} parent=31 // pred_fallthru
          _
        %v264 = vld [vmem:[%s239] sm:$0xf]
        %v265 = vld [vmem:[%s246] sm:$0xf]
        %v266 = vld [vmem:[%s253] sm:$0xf]
        %vm267 = vcmask 261120
        %v269 = vsel %vm267, %v264, 0
        %v272 = vsel %vm267, %v265, 0
        %274 = vmatprep.subr.bf16.mxu0 0
        %275 = vmatpush1.bf16.xpose.msra.mxu0 0
        %276 = vmatprep.subr.bf16.mxu0 0
        %277 = vmatpush1.bf16.xpose.msra.mxu0 0
        %278 = vmatprep.subr.bf16.mxu0 0
        %279 = vmatpush1.bf16.xpose.msra.mxu0 0
        %280 = vmatprep.subr.bf16.mxu0 0
        %281 = vmatpush1.bf16.xpose.msra.mxu0 0
        %282 = vmatprep.subr.bf16.mxu0 0
        %283 = vmatpush1.bf16.xpose.msra.mxu0 0
        %284 = vmatprep.subr.bf16.mxu0 0
        %285 = vmatpush1.bf16.xpose.msra.mxu0 0
        %286 = vmatprep.subr.bf16.mxu0 0
        %287 = vmatpush1.bf16.xpose.msra.mxu0 0
        %288 = vmatprep.subr.bf16.mxu0 0
        %289 = vmatpush1.bf16.xpose.msra.mxu0 %v272
        %290 = vmatprep.subr.bf16.mxu0 0
        %291 = vmatpush2.bf16.xpose.msra.mxu0 0
        %292 = vmatprep.subr.bf16.mxu0 0
        %293 = vmatpush2.bf16.xpose.msra.mxu0 0
        %294 = vmatprep.subr.bf16.mxu0 0
        %295 = vmatpush2.bf16.xpose.msra.mxu0 0
        %296 = vmatprep.subr.bf16.mxu0 0
        %297 = vmatpush2.bf16.xpose.msra.mxu0 0
        %298 = vmatprep.subr.bf16.mxu0 0
        %299 = vmatpush2.bf16.xpose.msra.mxu0 0
        %300 = vmatprep.subr.bf16.mxu0 0
        %301 = vmatpush2.bf16.xpose.msra.mxu0 0
        %302 = vmatprep.subr.bf16.mxu0 0
        %303 = vmatpush2.bf16.xpose.msra.mxu0 0
        %304 = vmatprep.subr.bf16.mxu0 0
        %305 = vmatpush2.bf16.xpose.msra.mxu0 0
        %306 = vmatprep.mubr.bf16.mxu0 0
        %307 = vmatmul.mubr.bf16.gmra.mxu0 %v269
        %v308 = vpop.f32.mrf.mxu0
        %v309 = vadd.f32 0.0, %v308
        %v310 = vpop.f32.mrf.mxu0
        %v311 = vpop.f32.mrf.mxu0
        %v312 = vpop.f32.mrf.mxu0
        %313 = vdwg.mxu0
        %v314 = vld [vmem:[#allocation2] sm:$0xff]
        %vm315 = vcmask 64512
        %v316 = vsel %vm315, %v309, -inf
        %317 = vmax.xlane.f32.xlu0 %v316
        %v318 = vpop.xlane.xlu0 %317
        %v319 = vmax.f32 %v314, %v318
        %v320 = vsub.f32 %v314, %v319
        %v321 = vmul.f32 %v320, 1.442695
        %v322 = vpow.pop %v321
        %324 = vset.pattern.permute.xlu0 0
        %325 = vperm.xlu0 %324, %v319
        %v326 = vpop.permute.xlu0 %325
        %v328 = vsub.f32 %v309, %v326
        %v329 = vmul.f32 %v328, 1.442695
        %v330 = vpow.pop %v329
        %v331 = vld [vmem:[#allocation3] sm:$0xff]
        %v332 = vmul.f32 %v322, %v331
        %v333 = vsel %vm315, %v330, 0.0
        %334 = vadd.xlane.f32.xlu0 %v333
        %v335 = vpop.xlane.xlu0 %334
        %v336 = vadd.f32 %v332, %v335
        %vm337 = vcmask 7168
        %338 = vst.msk [vmem:[#allocation3] sm:$0xff] %vm337, %v336
        %v339 = vld [vmem:[#allocation4] sm:$0xff]
        %341 = vset.pattern.permute.xlu0 0
        %342 = vperm.xlu0 %341, %v322
        %v343 = vpop.permute.xlu0 %342
        %v345 = vmul.f32 %v343, %v339
        %v346 = vpack.c.bf16 %v330, %v330
        %v348 = vsel %vm315, %v346, 0
        %vm350 = vcmask 1043456
        %v352 = vsel %vm350, %v266, 0
        %354 = vmatprep.subr.bf16.mxu0 0
        %355 = vmatpush1.bf16.msra.mxu0 0
        %356 = vmatprep.subr.bf16.mxu0 0
        %357 = vmatpush1.bf16.msra.mxu0 0
        %358 = vmatprep.subr.bf16.mxu0 0
        %359 = vmatpush1.bf16.msra.mxu0 0
        %360 = vmatprep.subr.bf16.mxu0 0
        %361 = vmatpush1.bf16.msra.mxu0 0
        %362 = vmatprep.subr.bf16.mxu0 0
        %363 = vmatpush1.bf16.msra.mxu0 0
        %364 = vmatprep.subr.bf16.mxu0 0
        %365 = vmatpush1.bf16.msra.mxu0 0
        %366 = vmatprep.subr.bf16.mxu0 0
        %367 = vmatpush1.bf16.msra.mxu0 0
        %368 = vmatprep.subr.bf16.mxu0 0
        %369 = vmatpush1.bf16.msra.mxu0 %v352
        %370 = vmatprep.subr.bf16.mxu0 0
        %371 = vmatpush2.bf16.msra.mxu0 0
        %372 = vmatprep.subr.bf16.mxu0 0
        %373 = vmatpush2.bf16.msra.mxu0 0
        %374 = vmatprep.subr.bf16.mxu0 0
        %375 = vmatpush2.bf16.msra.mxu0 0
        %376 = vmatprep.subr.bf16.mxu0 0
        %377 = vmatpush2.bf16.msra.mxu0 0
        %378 = vmatprep.subr.bf16.mxu0 0
        %379 = vmatpush2.bf16.msra.mxu0 0
        %380 = vmatprep.subr.bf16.mxu0 0
        %381 = vmatpush2.bf16.msra.mxu0 0
        %382 = vmatprep.subr.bf16.mxu0 0
        %383 = vmatpush2.bf16.msra.mxu0 0
        %384 = vmatprep.subr.bf16.mxu0 0
        %385 = vmatpush2.bf16.msra.mxu0 0
        %386 = vmatprep.mubr.bf16.mxu0 0
        %387 = vmatmul.mubr.bf16.gmra.mxu0 %v348
        %v388 = vpop.f32.mrf.mxu0
        %v389 = vadd.f32 0.0, %v388
        %v390 = vpop.f32.mrf.mxu0
        %v391 = vpop.f32.mrf.mxu0
        %v392 = vpop.f32.mrf.mxu0
        %393 = vdwg.mxu0
        %v394 = vadd.f32 %v345, %v389
        %395 = vst.msk [vmem:[#allocation4] sm:$0xff] %vm267, %v394
        %396 = vst.msk [vmem:[#allocation2] sm:$0xff] %vm337, %v319
        // Predicated region
        $region37: #{self_attention_v2.3} parent=31 // pred_check
          %p397 = pneg %p255
        $region38: #{self_attention_v2.3} parent=31 // pred_check_branch
          %399 = sbr.rel (%p397) target = $region40
        $region39: #{self_attention_v2.3} parent=31 // pred_region
          %v400 = vld [vmem:[#allocation3] sm:$0xff]
          %v401 = vrcp.pop %v400
          %v402 = vld [vmem:[#allocation4] sm:$0xff]
          %404 = vset.pattern.permute.xlu0 0
          %405 = vperm.xlu0 %404, %v401
          %v406 = vpop.permute.xlu0 %405
          %v408 = vmul.f32 %v402, %v406
          %409 = vst.msk [vmem:[%s232] sm:$0xff] %vm267, %v408
        $region40: #{self_attention_v2.3} parent=31 // pred_fallthru
          _
        %s410 = sand.u32 %s130, 1
        %s411 = scalar_lea.sflag [#allocation6], %s410
        %s412 = sand.u32 %s130, 1
        %s413 = smul.addr %s412, 8
        %s414 = scalar_lea.vmem [#allocation5], %s413
        // Predicated region
        $region41: #{self_attention_v2.3} parent=31 // pred_check
          %p415 = pneg %p140
        $region42: #{self_attention_v2.3} parent=31 // pred_check_branch
          %417 = sbr.rel (%p415) target = $region44
        $region43: #{self_attention_v2.3} parent=31 // pred_region
          %s419 = ssub.s32 128, 128
          %420 = vsyncadd %s411, %s419
          %s421 = sadd.s32 %s23, %s22
          %s422 = smul.addr %s421, 128
          %s423 = scalar_lea.hbm %s3, %s422
          %s425 = sshll.u32 %s414, 4
          %s426 = int_to_ptr.vmem [resolvable:$true] %s425
          %428 = dma.vmem_to_hbm [thread:$0]  %s426, 128, %s423, %s411
        $region44: #{self_attention_v2.3} parent=31 // pred_fallthru
          _
      $region32: #{self_attention_v2.3} parent=5 // pred_fallthru
        _
      %p429 = scmp.le.s32.totalorder 2, %s12
      // Predicated region
      $region45: #{self_attention_v2.3} parent=5 // pred_check
        %p430 = pneg %p429
      $region46: #{self_attention_v2.3} parent=5 // pred_check_branch
        %432 = sbr.rel (%p430) target = $region48
      $region47: #{self_attention_v2.3} parent=5 // pred_region
        %s433 = ssub.s32 %s12, 2
        // Predicated region
        $region49: #{self_attention_v2.3} parent=47 // pred_check
          %p434 = pneg %p146
        $region50: #{self_attention_v2.3} parent=47 // pred_check_branch
          %436 = sbr.rel (%p434) target = $region52
        $region51: #{self_attention_v2.3} parent=47 // pred_region
          %s437 = sand.u32 %s131, 1
          %s438 = scalar_lea.sflag [#allocation6], %s437
          %s439 = sand.u32 %s131, 1
          %s440 = smul.addr %s439, 8
          %s441 = scalar_lea.vmem [#allocation5], %s440
          %442 = dma.done %s438, 128
        $region52: #{self_attention_v2.3} parent=47 // pred_fallthru
          _
      $region48: #{self_attention_v2.3} parent=5 // pred_fallthru
        _
    $region6: #{self_attention_v2.3} parent=1 // loop_footer
      %s16 = sadd.s32 1, %s12
    $region7: #{self_attention_v2.3} parent=1 // loop_footer_branch
      %11 = sbr.rel target = $region3
    $region8: #{self_attention_v2.3} parent=1 // loop_exit
      _
    %443 = vsyncpa [#allocation6], 1
    %s444 = scalar_lea.sflag [#allocation6], 1
    %445 = vsyncpa %s444, 1

// kernel: self_attention_v2.2
$region0: #{self_attention_v2.2}
  #allocation0 [shape = 'u32[]', space=smem, size = 0x4, offset = 0x4, fixed_abs, tag = 'smem constant byte address 0x4 - core index']
  #allocation1 [shape = 'u32[144,128]{1,0:T(1,128)}', space=vmem, size = 0x12000, scoped, tag = 'internal scratch']
  %s0 = inlined_call_operand.hbm [shape: f32[16,32], index: 0, kind: input, shape index: {}]
  %s1 = inlined_call_operand.hbm [shape: bf16[3,32,32], index: 1, kind: input, shape index: {}]
  %s2 = inlined_call_operand.vmem [shape: f32[3,1,32], index: 2, kind: input, shape index: {}]
  %s3 = inlined_call_operand.vmem [shape: bf16[16,32], index: 3, kind: output, shape index: {0}]
  %s4 = inlined_call_operand.vmem [shape: bf16[16,32], index: 4, kind: output, shape index: {1}]
  %s5 = inlined_call_operand.vmem [shape: bf16[16,32], index: 5, kind: output, shape index: {2}]
  %6 = xla_tuple %s3, %s4, %s5
  %s7 = sld [smem:[#allocation0]]
  $region46: #{self_attention_v2.2} parent=0
    _
  %s9 = ssub.s32 1, %s7
  %s10 = scalar_select 0, %s9, %s7
  $region1: #{self_attention_v2.2} parent=0
    #allocation2 [shape = 'u8[8192]{0}', space=vmem, size = 0x2000, scoped, tag = 'input window, operand 0, single buffered']
    #allocation3 [shape = 's32[1]{0}', space=sflag, size = 0x4, scoped, tag = 'scoped memory for self_attention_v2.2']
    #allocation4 [shape = 'u8[24576]{0}', space=vmem, size = 0x6000, scoped, tag = 'input window, operand 1, single buffered']
    #allocation5 [shape = 's32[1]{0}', space=sflag, size = 0x4, scoped, tag = 'scoped memory for self_attention_v2.2']
    %11 = vsyncpa [#allocation3], 0
    %12 = vsyncpa [#allocation5], 0
    // Predicated region
    $region2: #{self_attention_v2.2} parent=1 // pred_check
      _
    $region3: #{self_attention_v2.2} parent=1 // pred_check_branch
      %14 = sbr.rel (0) target = $region5
    $region4: #{self_attention_v2.2} parent=1 // pred_region
      %s16 = ssub.s32 256, 256
      %17 = vsyncadd [#allocation3], %s16
      %s18 = sshll.u32 [#allocation2], 4
      %s19 = int_to_ptr.vmem [resolvable:$true] %s18
      %24 = dma.hbm_to_vmem [thread:$0]  %s0, 256, %s19, [#allocation3], 128, 128, 8
    $region5: #{self_attention_v2.2} parent=1 // pred_fallthru
      _
    // Predicated region
    $region6: #{self_attention_v2.2} parent=1 // pred_check
      _
    $region7: #{self_attention_v2.2} parent=1 // pred_check_branch
      %26 = sbr.rel (0) target = $region9
    $region8: #{self_attention_v2.2} parent=1 // pred_region
      %s28 = ssub.s32 768, 768
      %29 = vsyncadd [#allocation5], %s28
      %s30 = sshll.u32 [#allocation4], 4
      %s31 = int_to_ptr.vmem [resolvable:$true] %s30
      %36 = dma.hbm_to_vmem [thread:$0]  %s1, 768, %s31, [#allocation5], 64, 64, 4
    $region9: #{self_attention_v2.2} parent=1 // pred_fallthru
      _
    // Predicated region
    $region10: #{self_attention_v2.2} parent=1 // pred_check
      _
    $region11: #{self_attention_v2.2} parent=1 // pred_check_branch
      %38 = sbr.rel (0) target = $region13
    $region12: #{self_attention_v2.2} parent=1 // pred_region
      _
    $region13: #{self_attention_v2.2} parent=1 // pred_fallthru
      _
    // Predicated region
    $region14: #{self_attention_v2.2} parent=1 // pred_check
      _
    $region15: #{self_attention_v2.2} parent=1 // pred_check_branch
      %40 = sbr.rel (0) target = $region17
    $region16: #{self_attention_v2.2} parent=1 // pred_region
      %41 = dma.done [#allocation3], 256
    $region17: #{self_attention_v2.2} parent=1 // pred_fallthru
      _
    // Predicated region
    $region18: #{self_attention_v2.2} parent=1 // pred_check
      _
    $region19: #{self_attention_v2.2} parent=1 // pred_check_branch
      %43 = sbr.rel (0) target = $region21
    $region20: #{self_attention_v2.2} parent=1 // pred_region
      %44 = dma.done [#allocation5], 768
    $region21: #{self_attention_v2.2} parent=1 // pred_fallthru
      _
    %v46 = vld [vmem:[#allocation2] sm:$0xff]
    %v47 = vld [vmem:[#allocation2 + $0x8] sm:$0xff]
    %v48 = vpack.c.bf16 %v47, %v46
    %v49 = vld [vmem:[#allocation4] sm:$0xf]
    %v50 = vld [vmem:[#allocation4 + $0x4] sm:$0xf]
    %v51 = vld [vmem:[#allocation4 + $0x8] sm:$0xf]
    %v52 = vld [vmem:[#allocation4 + $0xc] sm:$0xf]
    %v53 = vld [vmem:[%s2] sm:$0x1]
    %v55 = vlaneseq
    %v56 = vshrl.u32 %v55, 7
    %v57 = vsub.s32 0, %v56
    %v58 = vrot.slane %v53, %v57
    %v64 = vunpack.c.l.b16 %v49
    %v65 = vunpack.c.l.b16 %v50
    %v66 = vunpack.c.l.b16 %v51
    %v67 = vunpack.c.l.b16 %v52
    %v68 = vpack.c.b16 %v65, %v64
    %v69 = vpack.c.b16 %v67, %v66
    %vm72 = vcmask 261120
    %v74 = vsel %vm72, %v48, 0
    %76 = vmatprep.subr.bf16.mxu0 0
    %77 = vmatpush1.bf16.msra.mxu0 0
    %78 = vmatprep.subr.bf16.mxu0 0
    %79 = vmatpush1.bf16.msra.mxu0 0
    %80 = vmatprep.subr.bf16.mxu0 0
    %81 = vmatpush1.bf16.msra.mxu0 0
    %82 = vmatprep.subr.bf16.mxu0 0
    %83 = vmatpush1.bf16.msra.mxu0 0
    %84 = vmatprep.subr.bf16.mxu0 0
    %85 = vmatpush1.bf16.msra.mxu0 0
    %86 = vmatprep.subr.bf16.mxu0 0
    %87 = vmatpush1.bf16.msra.mxu0 0
    %88 = vmatprep.subr.bf16.mxu0 0
    %89 = vmatpush1.bf16.msra.mxu0 %v69
    %90 = vmatprep.subr.bf16.mxu0 0
    %91 = vmatpush1.bf16.msra.mxu0 %v68
    %92 = vmatprep.subr.bf16.mxu0 0
    %93 = vmatpush2.bf16.msra.mxu0 0
    %94 = vmatprep.subr.bf16.mxu0 0
    %95 = vmatpush2.bf16.msra.mxu0 0
    %96 = vmatprep.subr.bf16.mxu0 0
    %97 = vmatpush2.bf16.msra.mxu0 0
    %98 = vmatprep.subr.bf16.mxu0 0
    %99 = vmatpush2.bf16.msra.mxu0 0
    %100 = vmatprep.subr.bf16.mxu0 0
    %101 = vmatpush2.bf16.msra.mxu0 0
    %102 = vmatprep.subr.bf16.mxu0 0
    %103 = vmatpush2.bf16.msra.mxu0 0
    %104 = vmatprep.subr.bf16.mxu0 0
    %105 = vmatpush2.bf16.msra.mxu0 0
    %106 = vmatprep.subr.bf16.mxu0 0
    %107 = vmatpush2.bf16.msra.mxu0 0
    %108 = vmatprep.mubr.bf16.mxu0 0
    %109 = vmatmul.mubr.bf16.gmra.mxu0 %v74
    %v110 = vpop.f32.mrf.mxu0
    %v111 = vadd.f32 %v58, %v110
    %v112 = vpop.f32.mrf.mxu0
    %v113 = vpop.f32.mrf.mxu0
    %v114 = vadd.f32 %v58, %v113
    %v115 = vpop.f32.mrf.mxu0
    %116 = vdwg.mxu0
    %v117 = vpack.c.bf16 %v114, %v111
    %v119 = vunpack.c.l.b16 %v117
    %v120 = vunpack.c.h.b16 %v117
    %v121 = vpack.c.b16 %v119, %v119
    %v122 = vpack.c.b16 %v120, %v120
    %vm125 = vcmask 257024
    %126 = vst.msk [vmem:[%s3] sm:$0xf] %vm125, %v121
    %127 = vst.msk [vmem:[%s3 + $0x4] sm:$0xf] %vm125, %v122
    %s128 = scalar_lea.vmem [#allocation4], 16
    %v129 = vld [vmem:[%s128] sm:$0xf]
    %v130 = vld [vmem:[%s128 + $0x4] sm:$0xf]
    %v131 = vld [vmem:[%s128 + $0x8] sm:$0xf]
    %v132 = vld [vmem:[%s128 + $0xc] sm:$0xf]
    %s133 = scalar_lea.vmem %s2, 1
    %v134 = vld [vmem:[%s133] sm:$0x1]
    %v136 = vlaneseq
    %v137 = vshrl.u32 %v136, 7
    %v138 = vsub.s32 0, %v137
    %v139 = vrot.slane %v134, %v138
    %v145 = vunpack.c.l.b16 %v129
    %v146 = vunpack.c.l.b16 %v130
    %v147 = vunpack.c.l.b16 %v131
    %v148 = vunpack.c.l.b16 %v132
    %v149 = vpack.c.b16 %v146, %v145
    %v150 = vpack.c.b16 %v148, %v147
    %153 = vmatprep.subr.bf16.mxu0 0
    %154 = vmatpush1.bf16.msra.mxu0 0
    %155 = vmatprep.subr.bf16.mxu0 0
    %156 = vmatpush1.bf16.msra.mxu0 0
    %157 = vmatprep.subr.bf16.mxu0 0
    %158 = vmatpush1.bf16.msra.mxu0 0
    %159 = vmatprep.subr.bf16.mxu0 0
    %160 = vmatpush1.bf16.msra.mxu0 0
    %161 = vmatprep.subr.bf16.mxu0 0
    %162 = vmatpush1.bf16.msra.mxu0 0
    %163 = vmatprep.subr.bf16.mxu0 0
    %164 = vmatpush1.bf16.msra.mxu0 0
    %165 = vmatprep.subr.bf16.mxu0 0
    %166 = vmatpush1.bf16.msra.mxu0 %v150
    %167 = vmatprep.subr.bf16.mxu0 0
    %168 = vmatpush1.bf16.msra.mxu0 %v149
    %169 = vmatprep.subr.bf16.mxu0 0
    %170 = vmatpush2.bf16.msra.mxu0 0
    %171 = vmatprep.subr.bf16.mxu0 0
    %172 = vmatpush2.bf16.msra.mxu0 0
    %173 = vmatprep.subr.bf16.mxu0 0
    %174 = vmatpush2.bf16.msra.mxu0 0
    %175 = vmatprep.subr.bf16.mxu0 0
    %176 = vmatpush2.bf16.msra.mxu0 0
    %177 = vmatprep.subr.bf16.mxu0 0
    %178 = vmatpush2.bf16.msra.mxu0 0
    %179 = vmatprep.subr.bf16.mxu0 0
    %180 = vmatpush2.bf16.msra.mxu0 0
    %181 = vmatprep.subr.bf16.mxu0 0
    %182 = vmatpush2.bf16.msra.mxu0 0
    %183 = vmatprep.subr.bf16.mxu0 0
    %184 = vmatpush2.bf16.msra.mxu0 0
    %185 = vmatprep.mubr.bf16.mxu0 0
    %186 = vmatmul.mubr.bf16.gmra.mxu0 %v74
    %v187 = vpop.f32.mrf.mxu0
    %v188 = vadd.f32 %v139, %v187
    %v189 = vpop.f32.mrf.mxu0
    %v190 = vpop.f32.mrf.mxu0
    %v191 = vadd.f32 %v139, %v190
    %v192 = vpop.f32.mrf.mxu0
    %193 = vdwg.mxu0
    %v194 = vpack.c.bf16 %v191, %v188
    %v196 = vunpack.c.l.b16 %v194
    %v197 = vunpack.c.h.b16 %v194
    %v198 = vpack.c.b16 %v196, %v196
    %v199 = vpack.c.b16 %v197, %v197
    %202 = vst.msk [vmem:[%s4] sm:$0xf] %vm125, %v198
    %203 = vst.msk [vmem:[%s4 + $0x4] sm:$0xf] %vm125, %v199
    %s204 = scalar_lea.vmem [#allocation4], 32
    %v205 = vld [vmem:[%s204] sm:$0xf]
    %v206 = vld [vmem:[%s204 + $0x4] sm:$0xf]
    %v207 = vld [vmem:[%s204 + $0x8] sm:$0xf]
    %v208 = vld [vmem:[%s204 + $0xc] sm:$0xf]
    %s209 = scalar_lea.vmem %s2, 2
    %v210 = vld [vmem:[%s209] sm:$0x1]
    %v212 = vlaneseq
    %v213 = vshrl.u32 %v212, 7
    %v214 = vsub.s32 0, %v213
    %v215 = vrot.slane %v210, %v214
    %v221 = vunpack.c.l.b16 %v205
    %v222 = vunpack.c.l.b16 %v206
    %v223 = vunpack.c.l.b16 %v207
    %v224 = vunpack.c.l.b16 %v208
    %v225 = vpack.c.b16 %v222, %v221
    %v226 = vpack.c.b16 %v224, %v223
    %229 = vmatprep.subr.bf16.mxu0 0
    %230 = vmatpush1.bf16.msra.mxu0 0
    %231 = vmatprep.subr.bf16.mxu0 0
    %232 = vmatpush1.bf16.msra.mxu0 0
    %233 = vmatprep.subr.bf16.mxu0 0
    %234 = vmatpush1.bf16.msra.mxu0 0
    %235 = vmatprep.subr.bf16.mxu0 0
    %236 = vmatpush1.bf16.msra.mxu0 0
    %237 = vmatprep.subr.bf16.mxu0 0
    %238 = vmatpush1.bf16.msra.mxu0 0
    %239 = vmatprep.subr.bf16.mxu0 0
    %240 = vmatpush1.bf16.msra.mxu0 0
    %241 = vmatprep.subr.bf16.mxu0 0
    %242 = vmatpush1.bf16.msra.mxu0 %v226
    %243 = vmatprep.subr.bf16.mxu0 0
    %244 = vmatpush1.bf16.msra.mxu0 %v225
    %245 = vmatprep.subr.bf16.mxu0 0
    %246 = vmatpush2.bf16.msra.mxu0 0
    %247 = vmatprep.subr.bf16.mxu0 0
    %248 = vmatpush2.bf16.msra.mxu0 0
    %249 = vmatprep.subr.bf16.mxu0 0
    %250 = vmatpush2.bf16.msra.mxu0 0
    %251 = vmatprep.subr.bf16.mxu0 0
    %252 = vmatpush2.bf16.msra.mxu0 0
    %253 = vmatprep.subr.bf16.mxu0 0
    %254 = vmatpush2.bf16.msra.mxu0 0
    %255 = vmatprep.subr.bf16.mxu0 0
    %256 = vmatpush2.bf16.msra.mxu0 0
    %257 = vmatprep.subr.bf16.mxu0 0
    %258 = vmatpush2.bf16.msra.mxu0 0
    %259 = vmatprep.subr.bf16.mxu0 0
    %260 = vmatpush2.bf16.msra.mxu0 0
    %261 = vmatprep.mubr.bf16.mxu0 0
    %262 = vmatmul.mubr.bf16.gmra.mxu0 %v74
    %v263 = vpop.f32.mrf.mxu0
    %v264 = vadd.f32 %v215, %v263
    %v265 = vpop.f32.mrf.mxu0
    %v266 = vpop.f32.mrf.mxu0
    %v267 = vadd.f32 %v215, %v266
    %v268 = vpop.f32.mrf.mxu0
    %269 = vdwg.mxu0
    %v270 = vpack.c.bf16 %v267, %v264
    %v272 = vunpack.c.l.b16 %v270
    %v273 = vunpack.c.h.b16 %v270
    %v274 = vpack.c.b16 %v272, %v272
    %v275 = vpack.c.b16 %v273, %v273
    %278 = vst.msk [vmem:[%s5] sm:$0xf] %vm125, %v274
    %279 = vst.msk [vmem:[%s5 + $0x4] sm:$0xf] %vm125, %v275
    // Predicated region
    $region22: #{self_attention_v2.2} parent=1 // pred_check
      _
    $region23: #{self_attention_v2.2} parent=1 // pred_check_branch
      %281 = sbr.rel (0) target = $region25
    $region24: #{self_attention_v2.2} parent=1 // pred_region
      _
    $region25: #{self_attention_v2.2} parent=1 // pred_fallthru
      _
    // Predicated region
    $region26: #{self_attention_v2.2} parent=1 // pred_check
      _
    $region27: #{self_attention_v2.2} parent=1 // pred_check_branch
      %283 = sbr.rel (0) target = $region29
    $region28: #{self_attention_v2.2} parent=1 // pred_region
      _
    $region29: #{self_attention_v2.2} parent=1 // pred_fallthru
      _
    // Predicated region
    $region30: #{self_attention_v2.2} parent=1 // pred_check
      _
    $region31: #{self_attention_v2.2} parent=1 // pred_check_branch
      %285 = sbr.rel (0) target = $region33
    $region32: #{self_attention_v2.2} parent=1 // pred_region
      _
    $region33: #{self_attention_v2.2} parent=1 // pred_fallthru
      _
    // Predicated region
    $region34: #{self_attention_v2.2} parent=1 // pred_check
      _
    $region35: #{self_attention_v2.2} parent=1 // pred_check_branch
      %287 = sbr.rel (0) target = $region37
    $region36: #{self_attention_v2.2} parent=1 // pred_region
      _
    $region37: #{self_attention_v2.2} parent=1 // pred_fallthru
      _
    // Predicated region
    $region38: #{self_attention_v2.2} parent=1 // pred_check
      _
    $region39: #{self_attention_v2.2} parent=1 // pred_check_branch
      %289 = sbr.rel (0) target = $region41
    $region40: #{self_attention_v2.2} parent=1 // pred_region
      _
    $region41: #{self_attention_v2.2} parent=1 // pred_fallthru
      _
    // Predicated region
    $region42: #{self_attention_v2.2} parent=1 // pred_check
      _
    $region43: #{self_attention_v2.2} parent=1 // pred_check_branch
      %291 = sbr.rel (0) target = $region45
    $region44: #{self_attention_v2.2} parent=1 // pred_region
      _
    $region45: #{self_attention_v2.2} parent=1 // pred_fallthru
      _
    %292 = vsyncpa [#allocation3], 1
    %293 = vsyncpa [#allocation5], 1

</llo_original>
